<compile_context>
chip_gen: v7x
topology: tpu7x:2x2x1
jax: 0.10.0
libtpu: 0.0.40
codegen_flags: <defaults>
</compile_context>

<pallas_src>
import numpy as np
import jax
import jax.numpy as jnp
from jax.experimental import pallas as pl
from jax.experimental.pallas import tpu as pltpu


# ----------------------- bilinear interpolation matrix -----------------------

def _bilinear_matrix(n_in, n_out):
    """PyTorch UpsamplingBilinear2d (align_corners=True) interpolation matrix."""
    A = np.zeros((n_out, n_in), dtype=np.float32)
    if n_in == 1:
        A[:, 0] = 1.0
        return jnp.asarray(A)
    scale = (n_in - 1) / (n_out - 1)
    for o in range(n_out):
        s = o * scale
        lo = int(np.floor(s))
        hi = min(lo + 1, n_in - 1)
        f = s - lo
        A[o, lo] += 1.0 - f
        A[o, hi] += f
    return jnp.asarray(A)


# ------------------------------- Pallas kernel -------------------------------

def _upsample_concat_kernel(x_ref, f_ref, ah_ref, awt_ref, o_ref):
    """Fused bilinear 2x upsample (align_corners=True) + channel concat, per batch.

    x_ref  : (1, C1, H, W)        tensor to upsample
    f_ref  : (1, C2, Ho, Wo)      skip feature (passthrough)
    ah_ref : (Ho, H)              H-axis interpolation matrix
    awt_ref: (W, Wo)              W-axis interpolation matrix (transposed)
    o_ref  : (1, C1 + C2, Ho, Wo) concatenated output
    """
    _, C1, H, W = x_ref.shape
    Ho = ah_ref.shape[0]
    Wo = awt_ref.shape[1]

    x = x_ref[0]                                         # (C1, H, W)

    # --- W-axis interpolation: one 2D MXU matmul, lane dim W -> Wo.
    # reshape only merges the sublane-major leading dims (H % 8 == 0): free.
    t = jnp.dot(x.reshape(C1 * H, W), awt_ref[...],
                preferred_element_type=jnp.float32)      # (C1*H, Wo)
    t = t.reshape(C1, H, Wo)                             # (C1, H, Wo)

    # --- H-axis interpolation: channel-batched matmul (C1, Ho, H) @ (C1, H, Wo).
    ah_b = jnp.broadcast_to(ah_ref[...], (C1, Ho, H))
    y = jax.lax.dot_general(
        ah_b, t,
        dimension_numbers=(((2,), (1,)), ((0,), (0,))),
        preferred_element_type=jnp.float32)              # (C1, Ho, Wo)

    # --- Fused concat: no separate HBM round-trip for jnp.concatenate.
    o_ref[0, :C1] = y.astype(o_ref.dtype)
    o_ref[0, C1:] = f_ref[0].astype(o_ref.dtype)


# --------------------------------- wrapper -----------------------------------

def up_sample_block_pallas(x, feature, *, scale_factor=2):
    """x: (N, C1, H, W), feature: (N, C2, s*H, s*W) -> (N, C1+C2, s*H, s*W). NCHW."""
    N, C1, H, W = x.shape
    Nf, C2, Hf, Wf = feature.shape
    Ho, Wo = scale_factor * H, scale_factor * W
    assert Nf == N and (Hf, Wf) == (Ho, Wo), "feature must match upsampled x"

    dtype = jnp.promote_types(x.dtype, feature.dtype)
    x = x.astype(dtype)
    feature = feature.astype(dtype)

    ah = _bilinear_matrix(H, Ho)                         # (Ho, H)
    awt = jnp.transpose(_bilinear_matrix(W, Wo))         # (W, Wo)

    return pl.pallas_call(
        _upsample_concat_kernel,
        out_shape=jax.ShapeDtypeStruct((N, C1 + C2, Ho, Wo), dtype),
        grid=(N,),
        in_specs=[
            pl.BlockSpec((1, C1, H, W), lambda n: (n, 0, 0, 0)),
            pl.BlockSpec((1, C2, Ho, Wo), lambda n: (n, 0, 0, 0)),
            pl.BlockSpec((Ho, H), lambda n: (0, 0)),
            pl.BlockSpec((W, Wo), lambda n: (0, 0)),
        ],
        out_specs=pl.BlockSpec((1, C1 + C2, Ho, Wo), lambda n: (n, 0, 0, 0)),
        compiler_params=pltpu.CompilerParams(
            dimension_semantics=("parallel",)),
    )(x, feature, ah, awt)


# ------------------------------ JAX reference ---------------------------------

def up_sample_block_ref(x, feature, *, scale_factor=2):
    N, C1, H, W = x.shape
    ah = _bilinear_matrix(H, scale_factor * H)
    aw = _bilinear_matrix(W, scale_factor * W)
    xu = jnp.einsum("oh,nchw->ncow", ah, x,
                    precision=jax.lax.Precision.HIGHEST)
    xu = jnp.einsum("pw,ncow->ncop", aw, xu,
                    precision=jax.lax.Precision.HIGHEST)
    return jnp.concatenate([xu, feature], axis=1)


# ----------------------------------- main --------------------------------------

if __name__ == "__main__":
    N, C1, C2, H, W = 2, 4, 4, 16, 16

    key = jax.random.PRNGKey(0)
    kx, kf = jax.random.split(key)
    x = jax.random.normal(kx, (N, C1, H, W), jnp.float32)          # NCHW, like PyTorch
    feature = jax.random.normal(kf, (N, C2, 2 * H, 2 * W), jnp.float32)

    fwd = jax.jit(up_sample_block_pallas)
    out = jax.block_until_ready(fwd(x, feature))
    assert out.shape == (N, C1 + C2, 2 * H, 2 * W), out.shape

    ref = jax.block_until_ready(up_sample_block_ref(x, feature))
    err = float(jnp.max(jnp.abs(out - ref)) / (jnp.max(jnp.abs(ref)) + 1e-6))
    assert err < 1e-2, f"Pallas vs reference mismatch, normalized max err = {err}"

    # Passthrough channels must be bit-exact.
    assert bool(jnp.all(out[:, C1:] == feature)), "feature passthrough corrupted"

    print("KERNEL_OK")
</pallas_src>

<mosaic_0001>
module attributes {stable_mosaic.version = 11 : i64} {
  func.func @_upsample_concat_kernel(%arg0: i32, %arg1: memref<1x4x16x16xf32, #tpu.memory_space<vmem>>, %arg2: memref<1x4x32x32xf32, #tpu.memory_space<vmem>>, %arg3: memref<32x16xf32, #tpu.memory_space<vmem>>, %arg4: memref<16x32xf32, #tpu.memory_space<vmem>>, %arg5: memref<1x8x32x32xf32, #tpu.memory_space<vmem>>) attributes {dimension_semantics = [#tpu.dimension_semantics<parallel>], iteration_bounds = array<i64: 2>, scalar_prefetch = 0 : i64, scratch_operands = 0 : i64, tpu.core_type = #tpu.core_type<tc>, window_params = [{transform_indices = @transform_0, window_bounds = array<i64: 1, 4, 16, 16>}, {transform_indices = @transform_1, window_bounds = array<i64: 1, 4, 32, 32>}, {pipeline_mode = #tpu.pipeline_mode<synchronous>, transform_indices = @transform_2, window_bounds = array<i64: 32, 16>}, {pipeline_mode = #tpu.pipeline_mode<synchronous>, transform_indices = @transform_3, window_bounds = array<i64: 16, 32>}, {transform_indices = @transform_4, window_bounds = array<i64: 1, 8, 32, 32>}]} {
    %c0 = arith.constant 0 : index
    %c0_0 = arith.constant 0 : index
    %c0_1 = arith.constant 0 : index
    %c0_2 = arith.constant 0 : index
    %0 = vector.load %arg1[%c0, %c0_0, %c0_1, %c0_2] : memref<1x4x16x16xf32, #tpu.memory_space<vmem>>, vector<1x4x16x16xf32>
    %1 = vector.shape_cast %0 : vector<1x4x16x16xf32> to vector<4x16x16xf32>
    %2 = vector.shape_cast %1 : vector<4x16x16xf32> to vector<64x16xf32>
    %c0_3 = arith.constant 0 : index
    %c0_4 = arith.constant 0 : index
    %3 = vector.load %arg4[%c0_3, %c0_4] : memref<16x32xf32, #tpu.memory_space<vmem>>, vector<16x32xf32>
    %cst = arith.constant dense<0.000000e+00> : vector<64x32xf32>
    %4 = tpu.matmul %2, %3, %cst {dimension_numbers = #tpu.dot_dimension_numbers<[1], [0], [0], [1], [0, 0, 1, 1], [], []>} : vector<64x16xf32>, vector<16x32xf32>, vector<64x32xf32> -> vector<64x32xf32>
    %5 = vector.shape_cast %4 : vector<64x32xf32> to vector<4x16x32xf32>
    %c0_5 = arith.constant 0 : index
    %c0_6 = arith.constant 0 : index
    %6 = vector.load %arg3[%c0_5, %c0_6] : memref<32x16xf32, #tpu.memory_space<vmem>>, vector<32x16xf32>
    %7 = vector.shape_cast %6 : vector<32x16xf32> to vector<1x32x16xf32>
    %8 = vector.broadcast %7 : vector<1x32x16xf32> to vector<4x32x16xf32>
    %cst_7 = arith.constant dense<0.000000e+00> : vector<4x32x32xf32>
    %9 = tpu.matmul %8, %5, %cst_7 {dimension_numbers = #tpu.dot_dimension_numbers<[2], [1], [1], [2], [0, 0, 0, 1, 1, 2], [0], [0]>} : vector<4x32x16xf32>, vector<4x16x32xf32>, vector<4x32x32xf32> -> vector<4x32x32xf32>
    %c0_8 = arith.constant 0 : index
    %c0_9 = arith.constant 0 : index
    %c0_10 = arith.constant 0 : index
    %c0_11 = arith.constant 0 : index
    %10 = vector.load %arg5[%c0_8, %c0_9, %c0_10, %c0_11] : memref<1x8x32x32xf32, #tpu.memory_space<vmem>>, vector<1x4x32x32xf32>
    %11 = vector.shape_cast %10 : vector<1x4x32x32xf32> to vector<4x32x32xf32>
    %12 = vector.shape_cast %9 : vector<4x32x32xf32> to vector<1x4x32x32xf32>
    tpu.vector_store %arg5[%c0_8, %c0_9, %c0_10, %c0_11], %12 {strides = array<i32>} : memref<1x8x32x32xf32, #tpu.memory_space<vmem>>, vector<1x4x32x32xf32>,
    %c0_12 = arith.constant 0 : index
    %c0_13 = arith.constant 0 : index
    %c0_14 = arith.constant 0 : index
    %c0_15 = arith.constant 0 : index
    %13 = vector.load %arg2[%c0_12, %c0_13, %c0_14, %c0_15] : memref<1x4x32x32xf32, #tpu.memory_space<vmem>>, vector<1x4x32x32xf32>
    %14 = vector.shape_cast %13 : vector<1x4x32x32xf32> to vector<4x32x32xf32>
    %c0_16 = arith.constant 0 : index
    %c4 = arith.constant 4 : index
    %c0_17 = arith.constant 0 : index
    %c0_18 = arith.constant 0 : index
    %15 = vector.load %arg5[%c0_16, %c4, %c0_17, %c0_18] : memref<1x8x32x32xf32, #tpu.memory_space<vmem>>, vector<1x4x32x32xf32>
    %16 = vector.shape_cast %15 : vector<1x4x32x32xf32> to vector<4x32x32xf32>
    %17 = vector.shape_cast %14 : vector<4x32x32xf32> to vector<1x4x32x32xf32>
    tpu.vector_store %arg5[%c0_16, %c4, %c0_17, %c0_18], %17 {strides = array<i32>} : memref<1x8x32x32xf32, #tpu.memory_space<vmem>>, vector<1x4x32x32xf32>,
    return
  }
  func.func @transform_0(%arg0: i32) -> (i32, i32, i32, i32) {
    %c0_i32 = arith.constant 0 : i32
    %c0_i32_0 = arith.constant 0 : i32
    %c0_i32_1 = arith.constant 0 : i32
    %c0_i32_2 = arith.constant 0 : i32
    return %arg0, %c0_i32, %c0_i32_0, %c0_i32_1 : i32, i32, i32, i32
  }
  func.func @transform_1(%arg0: i32) -> (i32, i32, i32, i32) {
    %c0_i32 = arith.constant 0 : i32
    %c0_i32_0 = arith.constant 0 : i32
    %c0_i32_1 = arith.constant 0 : i32
    %c0_i32_2 = arith.constant 0 : i32
    return %arg0, %c0_i32, %c0_i32_0, %c0_i32_1 : i32, i32, i32, i32
  }
  func.func @transform_2(%arg0: i32) -> (i32, i32) {
    %c0_i32 = arith.constant 0 : i32
    %c0_i32_0 = arith.constant 0 : i32
    %c0_i32_1 = arith.constant 0 : i32
    return %c0_i32, %c0_i32_0 : i32, i32
  }
  func.func @transform_3(%arg0: i32) -> (i32, i32) {
    %c0_i32 = arith.constant 0 : i32
    %c0_i32_0 = arith.constant 0 : i32
    %c0_i32_1 = arith.constant 0 : i32
    return %c0_i32, %c0_i32_0 : i32, i32
  }
  func.func @transform_4(%arg0: i32) -> (i32, i32, i32, i32) {
    %c0_i32 = arith.constant 0 : i32
    %c0_i32_0 = arith.constant 0 : i32
    %c0_i32_1 = arith.constant 0 : i32
    %c0_i32_2 = arith.constant 0 : i32
    return %arg0, %c0_i32, %c0_i32_0, %c0_i32_1 : i32, i32, i32, i32
  }
}

</mosaic_0001>

<llo_original>
// kernel: up_sample_block_pallas.1
$region0: #{up_sample_block_pallas.1}
  #allocation0 [shape = 'u32[]', space=smem, size = 0x4, offset = 0x4, fixed_abs, tag = 'smem constant byte address 0x4 - core index']
  #allocation1 [shape = 'u32[144,128]{1,0:T(1,128)}', space=vmem, size = 0x12000, scoped, tag = 'internal scratch']
  %s0 = inlined_call_operand.hbm [shape: f32[2,4,16,16], index: 0, kind: input, shape index: {}]
  %s1 = inlined_call_operand.hbm [shape: f32[2,4,32,32], index: 1, kind: input, shape index: {}]
  %s2 = inlined_call_operand.hbm [shape: f32[32,16], index: 2, kind: input, shape index: {}]
  %s3 = inlined_call_operand.hbm [shape: f32[16,32], index: 3, kind: input, shape index: {}]
  %s4 = inlined_call_operand.hbm [shape: f32[2,8,32,32], index: 4, kind: output, shape index: {}]
  %s5 = sld [smem:[#allocation0]]
  $region65: #{up_sample_block_pallas.1} parent=0
    _
  %s7 = ssub.s32 1, %s5
  %s8 = scalar_select 0, %s7, %s5
  $region1: #{up_sample_block_pallas.1} parent=0
    #allocation2 [shape = 'u8[65536]{0}', space=vmem, size = 0x10000, scoped, tag = 'input window, operand 0']
    #allocation3 [shape = 's32[2]{0}', space=sflag, size = 0x8, scoped, tag = 'scoped memory for up_sample_block_pallas.1']
    #allocation4 [shape = 's32[2]{0}', space=sflag, size = 0x8, scoped, tag = 'scoped memory for up_sample_block_pallas.1']
    #allocation5 [shape = 'u8[131072]{0}', space=vmem, size = 0x20000, scoped, tag = 'input window, operand 1']
    #allocation6 [shape = 's32[2]{0}', space=sflag, size = 0x8, scoped, tag = 'scoped memory for up_sample_block_pallas.1']
    #allocation7 [shape = 'u8[16384]{0}', space=vmem, size = 0x4000, scoped, tag = 'input window, operand 2, single buffered']
    #allocation8 [shape = 'u8[8192]{0}', space=vmem, size = 0x2000, scoped, tag = 'input window, operand 3, single buffered']
    #allocation9 [shape = 's32[1]{0}', space=sflag, size = 0x4, scoped, tag = 'scoped memory for up_sample_block_pallas.1']
    #allocation10 [shape = 'u8[262144]{0}', space=vmem, size = 0x40000, scoped, tag = 'output window, operand 0']
    %9 = vsyncpa [#allocation3], 0
    %s10 = scalar_lea.sflag [#allocation3], 1
    %11 = vsyncpa %s10, 0
    %12 = vsyncpa [#allocation6], 0
    %s13 = scalar_lea.sflag [#allocation6], 1
    %14 = vsyncpa %s13, 0
    %15 = vsyncpa [#allocation9], 0
    %16 = vsyncpa [#allocation4], 0
    %s17 = scalar_lea.sflag [#allocation4], 1
    %18 = vsyncpa %s17, 0
    loop: start=0, step=1, limit=4
    $region2: #{up_sample_block_pallas.1} parent=1 // loop_pre_header
      _
    $region3: #{up_sample_block_pallas.1} parent=1 // loop_header
      %s20 = sphi 0, %s24
      %p21 = scmp.ge.s32.totalorder %s20, 4
      %s30 = sphi 0, %s32
      %s33 = sphi 0, %s30
      %s34 = sphi 0, %s33
      %s50 = sphi 0, %s34
      %s56 = sphi 0, %s58
      %s59 = sphi 0, %s56
      %s60 = sphi 0, %s59
      %s76 = sphi 0, %s60
      %s80 = sphi 0, %s80
      %s82 = sphi 0, %s80
      %s83 = sphi 0, %s82
      %s97 = sphi 0, %s83
      %s101 = sphi 0, %s101
      %s103 = sphi 0, %s101
      %s104 = sphi 0, %s103
      %s118 = sphi 0, %s104
      %s124 = sphi 0, %s126
      %s127 = sphi 0, %s124
      %s128 = sphi 0, %s127
      %s144 = sphi 0, %s128
    $region4: #{up_sample_block_pallas.1} parent=1 // loop_header_branch
      %23 = sbr.rel (%p21) target = $region8
    $region5: #{up_sample_block_pallas.1} parent=1 // loop_body
      %s25 = ssub.s32 %s20, 1
      %s26 = ssub.s32 %s20, 2
      %s27 = sadd.s32 %s20, 1
      %s28 = ssub.s32 %s20, %s27
      %p29 = scmp.eq.s32.totalorder %s28, 0
      %s31 = sadd.s32 %s30, 1
      %s32 = scalar_select %p29, %s30, %s31
      %p35 = pneg %p29
      %p36 = scmp.eq.s32.totalorder %s20, 1
      %p37 = por %p35, %p36
      %p38 = scmp.ne.s32.totalorder %s30, %s33
      %p39 = scmp.eq.s32.totalorder %s20, 0
      %p40 = por %p38, %p39
      %p41 = scmp.ne.s32.totalorder %s30, %s33
      %p42 = scmp.eq.s32.totalorder %s25, 1
      %p43 = por %p41, %p42
      %p44 = scmp.ne.s32.totalorder %s33, %s34
      %p45 = scmp.eq.s32.totalorder %s25, 0
      %p46 = por %p44, %p45
      %p47 = scmp.ne.s32.totalorder %s33, %s34
      %p48 = scmp.eq.s32.totalorder %s26, 1
      %p49 = por %p47, %p48
      %p51 = scmp.ne.s32.totalorder %s34, %s50
      %p52 = scmp.eq.s32.totalorder %s26, 0
      %p53 = por %p51, %p52
      %s54 = ssub.s32 %s20, %s27
      %p55 = scmp.eq.s32.totalorder %s54, 0
      %s57 = sadd.s32 %s56, 1
      %s58 = scalar_select %p55, %s56, %s57
      %p61 = pneg %p55
      %p62 = scmp.eq.s32.totalorder %s20, 1
      %p63 = por %p61, %p62
      %p64 = scmp.ne.s32.totalorder %s56, %s59
      %p65 = scmp.eq.s32.totalorder %s20, 0
      %p66 = por %p64, %p65
      %p67 = scmp.ne.s32.totalorder %s56, %s59
      %p68 = scmp.eq.s32.totalorder %s25, 1
      %p69 = por %p67, %p68
      %p70 = scmp.ne.s32.totalorder %s59, %s60
      %p71 = scmp.eq.s32.totalorder %s25, 0
      %p72 = por %p70, %p71
      %p73 = scmp.ne.s32.totalorder %s59, %s60
      %p74 = scmp.eq.s32.totalorder %s26, 1
      %p75 = por %p73, %p74
      %p77 = scmp.ne.s32.totalorder %s60, %s76
      %p78 = scmp.eq.s32.totalorder %s26, 0
      %p79 = por %p77, %p78
      %s81 = sadd.s32 %s80, 1
      %p84 = scmp.eq.s32.totalorder %s20, 1
      %p85 = scmp.ne.s32.totalorder %s80, %s82
      %p86 = scmp.eq.s32.totalorder %s20, 0
      %p87 = por %p85, %p86
      %p88 = scmp.ne.s32.totalorder %s80, %s82
      %p89 = scmp.eq.s32.totalorder %s25, 1
      %p90 = por %p88, %p89
      %p91 = scmp.ne.s32.totalorder %s82, %s83
      %p92 = scmp.eq.s32.totalorder %s25, 0
      %p93 = por %p91, %p92
      %p94 = scmp.ne.s32.totalorder %s82, %s83
      %p95 = scmp.eq.s32.totalorder %s26, 1
      %p96 = por %p94, %p95
      %p98 = scmp.ne.s32.totalorder %s83, %s97
      %p99 = scmp.eq.s32.totalorder %s26, 0
      %p100 = por %p98, %p99
      %s102 = sadd.s32 %s101, 1
      %p105 = scmp.eq.s32.totalorder %s20, 1
      %p106 = scmp.ne.s32.totalorder %s101, %s103
      %p107 = scmp.eq.s32.totalorder %s20, 0
      %p108 = por %p106, %p107
      %p109 = scmp.ne.s32.totalorder %s101, %s103
      %p110 = scmp.eq.s32.totalorder %s25, 1
      %p111 = por %p109, %p110
      %p112 = scmp.ne.s32.totalorder %s103, %s104
      %p113 = scmp.eq.s32.totalorder %s25, 0
      %p114 = por %p112, %p113
      %p115 = scmp.ne.s32.totalorder %s103, %s104
      %p116 = scmp.eq.s32.totalorder %s26, 1
      %p117 = por %p115, %p116
      %p119 = scmp.ne.s32.totalorder %s104, %s118
      %p120 = scmp.eq.s32.totalorder %s26, 0
      %p121 = por %p119, %p120
      %s122 = ssub.s32 %s20, %s27
      %p123 = scmp.eq.s32.totalorder %s122, 0
      %s125 = sadd.s32 %s124, 1
      %s126 = scalar_select %p123, %s124, %s125
      %p129 = pneg %p123
      %p130 = scmp.eq.s32.totalorder %s20, 1
      %p131 = por %p129, %p130
      %p132 = scmp.ne.s32.totalorder %s124, %s127
      %p133 = scmp.eq.s32.totalorder %s20, 0
      %p134 = por %p132, %p133
      %p135 = scmp.ne.s32.totalorder %s124, %s127
      %p136 = scmp.eq.s32.totalorder %s25, 1
      %p137 = por %p135, %p136
      %p138 = scmp.ne.s32.totalorder %s127, %s128
      %p139 = scmp.eq.s32.totalorder %s25, 0
      %p140 = por %p138, %p139
      %p141 = scmp.ne.s32.totalorder %s127, %s128
      %p142 = scmp.eq.s32.totalorder %s26, 1
      %p143 = por %p141, %p142
      %p145 = scmp.ne.s32.totalorder %s128, %s144
      %p146 = scmp.eq.s32.totalorder %s26, 0
      %p147 = por %p145, %p146
      %p148 = scmp.le.s32.totalorder 1, %s20
      %p149 = scmp.lt.s32.totalorder %s20, 3
      %p150 = pnand %p148, %p149
      %p151 = pneg %p150
      // Predicated region
      $region9: #{up_sample_block_pallas.1} parent=5 // pred_check
        _
      $region10: #{up_sample_block_pallas.1} parent=5 // pred_check_branch
        %153 = sbr.rel (%p150) target = $region12
      $region11: #{up_sample_block_pallas.1} parent=5 // pred_region
        %s154 = ssub.s32 %s20, 1
        // Predicated region
        $region13: #{up_sample_block_pallas.1} parent=11 // pred_check
          %p155 = pneg %p93
        $region14: #{up_sample_block_pallas.1} parent=11 // pred_check_branch
          %157 = sbr.rel (%p155) target = $region16
        $region15: #{up_sample_block_pallas.1} parent=11 // pred_region
          %s159 = ssub.s32 512, 512
          %160 = vsyncadd [#allocation6], %s159
          %s161 = sshll.u32 [#allocation7], 4
          %s162 = int_to_ptr.vmem [resolvable:$true] %s161
          %167 = dma.hbm_to_vmem [thread:$0]  %s2, 512, %s162, [#allocation6], 128, 128, 8
        $region16: #{up_sample_block_pallas.1} parent=11 // pred_fallthru
          _
        // Predicated region
        $region17: #{up_sample_block_pallas.1} parent=11 // pred_check
          %p168 = pneg %p114
        $region18: #{up_sample_block_pallas.1} parent=11 // pred_check_branch
          %170 = sbr.rel (%p168) target = $region20
        $region19: #{up_sample_block_pallas.1} parent=11 // pred_region
          %s172 = ssub.s32 256, 256
          %173 = vsyncadd [#allocation9], %s172
          %s174 = sshll.u32 [#allocation8], 4
          %s175 = int_to_ptr.vmem [resolvable:$true] %s174
          %180 = dma.hbm_to_vmem [thread:$0]  %s3, 256, %s175, [#allocation9], 128, 128, 8
        $region20: #{up_sample_block_pallas.1} parent=11 // pred_fallthru
          _
      $region12: #{up_sample_block_pallas.1} parent=5 // pred_fallthru
        _
      %p181 = scmp.lt.s32.totalorder %s20, 2
      // Predicated region
      $region21: #{up_sample_block_pallas.1} parent=5 // pred_check
        %p182 = pneg %p181
      $region22: #{up_sample_block_pallas.1} parent=5 // pred_check_branch
        %184 = sbr.rel (%p182) target = $region24
      $region23: #{up_sample_block_pallas.1} parent=5 // pred_region
        // Predicated region
        $region25: #{up_sample_block_pallas.1} parent=23 // pred_check
          %p185 = pneg %p40
        $region26: #{up_sample_block_pallas.1} parent=23 // pred_check_branch
          %187 = sbr.rel (%p185) target = $region28
        $region27: #{up_sample_block_pallas.1} parent=23 // pred_region
          %s188 = sand.u32 %s30, 1
          %s189 = scalar_lea.sflag [#allocation3], %s188
          %s190 = sand.u32 %s30, 1
          %s191 = smul.addr %s190, 64
          %s192 = scalar_lea.vmem [#allocation2], %s191
          %s194 = ssub.s32 1024, 1024
          %195 = vsyncadd %s189, %s194
          %s196 = smul.addr %s20, 8
          %s197 = smul.addr %s196, 128
          %s198 = scalar_lea.hbm %s0, %s197
          %s199 = sshll.u32 %s192, 4
          %s200 = int_to_ptr.vmem [resolvable:$true] %s199
          %205 = dma.hbm_to_vmem [thread:$0]  %s198, 1024, %s200, %s189, 128, 128, 8
        $region28: #{up_sample_block_pallas.1} parent=23 // pred_fallthru
          _
        // Predicated region
        $region29: #{up_sample_block_pallas.1} parent=23 // pred_check
          %p206 = pneg %p66
        $region30: #{up_sample_block_pallas.1} parent=23 // pred_check_branch
          %208 = sbr.rel (%p206) target = $region32
        $region31: #{up_sample_block_pallas.1} parent=23 // pred_region
          %s209 = sand.u32 %s20, 1
          %s210 = scalar_lea.sflag [#allocation6], %s209
          %s211 = sand.u32 %s56, 1
          %s212 = smul.addr %s211, 128
          %s213 = scalar_lea.vmem [#allocation5], %s212
          %s215 = ssub.s32 2048, 2048
          %216 = vsyncadd %s210, %s215
          %s217 = smul.addr %s20, 16
          %s218 = smul.addr %s217, 128
          %s219 = scalar_lea.hbm %s1, %s218
          %s220 = sshll.u32 %s213, 4
          %s221 = int_to_ptr.vmem [resolvable:$true] %s220
          %226 = dma.hbm_to_vmem [thread:$0]  %s219, 2048, %s221, %s210, 128, 128, 8
        $region32: #{up_sample_block_pallas.1} parent=23 // pred_fallthru
          _
      $region24: #{up_sample_block_pallas.1} parent=5 // pred_fallthru
        _
      %p227 = scmp.le.s32.totalorder 1, %s20
      %p228 = scmp.lt.s32.totalorder %s20, 3
      %p229 = pnand %p227, %p228
      %p230 = pneg %p229
      // Predicated region
      $region33: #{up_sample_block_pallas.1} parent=5 // pred_check
        _
      $region34: #{up_sample_block_pallas.1} parent=5 // pred_check_branch
        %232 = sbr.rel (%p229) target = $region36
      $region35: #{up_sample_block_pallas.1} parent=5 // pred_region
        %s233 = ssub.s32 %s20, 1
        %s234 = sand.u32 %s33, 1
        %s235 = scalar_lea.sflag [#allocation3], %s234
        %s236 = sand.u32 %s33, 1
        %s237 = smul.addr %s236, 64
        %s238 = scalar_lea.vmem [#allocation2], %s237
        // Predicated region
        $region37: #{up_sample_block_pallas.1} parent=35 // pred_check
          %p239 = pneg %p46
        $region38: #{up_sample_block_pallas.1} parent=35 // pred_check_branch
          %241 = sbr.rel (%p239) target = $region40
        $region39: #{up_sample_block_pallas.1} parent=35 // pred_region
          %242 = dma.done %s235, 1024
        $region40: #{up_sample_block_pallas.1} parent=35 // pred_fallthru
          _
        %s243 = sand.u32 %s25, 1
        %s244 = scalar_lea.sflag [#allocation6], %s243
        %s245 = sand.u32 %s59, 1
        %s246 = smul.addr %s245, 128
        %s247 = scalar_lea.vmem [#allocation5], %s246
        // Predicated region
        $region41: #{up_sample_block_pallas.1} parent=35 // pred_check
          %p248 = pneg %p72
        $region42: #{up_sample_block_pallas.1} parent=35 // pred_check_branch
          %250 = sbr.rel (%p248) target = $region44
        $region43: #{up_sample_block_pallas.1} parent=35 // pred_region
          %251 = dma.done %s244, 2048
        $region44: #{up_sample_block_pallas.1} parent=35 // pred_fallthru
          _
        // Predicated region
        $region45: #{up_sample_block_pallas.1} parent=35 // pred_check
          %p252 = pneg %p93
        $region46: #{up_sample_block_pallas.1} parent=35 // pred_check_branch
          %254 = sbr.rel (%p252) target = $region48
        $region47: #{up_sample_block_pallas.1} parent=35 // pred_region
          %255 = dma.done [#allocation6], 512
        $region48: #{up_sample_block_pallas.1} parent=35 // pred_fallthru
          _
        // Predicated region
        $region49: #{up_sample_block_pallas.1} parent=35 // pred_check
          %p256 = pneg %p114
        $region50: #{up_sample_block_pallas.1} parent=35 // pred_check_branch
          %258 = sbr.rel (%p256) target = $region52
        $region51: #{up_sample_block_pallas.1} parent=35 // pred_region
          %259 = dma.done [#allocation9], 256
        $region52: #{up_sample_block_pallas.1} parent=35 // pred_fallthru
          _
        %s260 = sand.u32 %s33, 1
        %s261 = scalar_lea.sflag [#allocation3], %s260
        %s262 = sand.u32 %s33, 1
        %s263 = smul.addr %s262, 64
        %s264 = scalar_lea.vmem [#allocation2], %s263
        %p265 = pneg %p46
        %p266 = pneg %p43
        %s267 = sand.u32 %s25, 1
        %s268 = scalar_lea.sflag [#allocation6], %s267
        %s269 = sand.u32 %s59, 1
        %s270 = smul.addr %s269, 128
        %s271 = scalar_lea.vmem [#allocation5], %s270
        %p272 = pneg %p72
        %p273 = pneg %p69
        %p274 = pneg %p93
        %p275 = pneg %p90
        %p276 = pneg %p114
        %p277 = pneg %p111
        %p278 = pneg %p140
        %p279 = pneg %p137
        %s280 = sand.u32 %s127, 1
        %s281 = scalar_lea.sflag [#allocation4], %s280
        %s282 = sand.u32 %s127, 1
        %s283 = smul.addr %s282, 256
        %s284 = scalar_lea.vmem [#allocation10], %s283
        %v285 = vld [vmem:[%s238] sm:$0xff]
        %v286 = vld [vmem:[%s238 + $0x8] sm:$0xff]
        %v287 = vld [vmem:[%s238 + $0x10] sm:$0xff]
        %v288 = vld [vmem:[%s238 + $0x18] sm:$0xff]
        %v289 = vld [vmem:[%s238 + $0x20] sm:$0xff]
        %v290 = vld [vmem:[%s238 + $0x28] sm:$0xff]
        %v291 = vld [vmem:[%s238 + $0x30] sm:$0xff]
        %v292 = vld [vmem:[%s238 + $0x38] sm:$0xff]
        %v293 = vld [vmem:[#allocation8] sm:$0xff]
        %v294 = vld [vmem:[#allocation8 + $0x8] sm:$0xff]
        %vm295 = vcmask 130048
        %v297 = vsel %vm295, %v285, 0
        %v300 = vsel %vm295, %v286, 0
        %v303 = vsel %vm295, %v287, 0
        %v306 = vsel %vm295, %v288, 0
        %v309 = vsel %vm295, %v289, 0
        %v312 = vsel %vm295, %v290, 0
        %v315 = vsel %vm295, %v291, 0
        %v318 = vsel %vm295, %v292, 0
        %320 = vmatprep.subr.mxu0 0.0
        %321 = vmatpush1.msra.mxu0 %v293
        %322 = vmatprep.subr.mxu0 0.0
        %323 = vmatpush1.msra.mxu0 %v294
        %324 = vmatprep.subr.mxu0 0.0
        %325 = vmatpush1.msra.mxu0 0.0
        %326 = vmatprep.subr.mxu0 0.0
        %327 = vmatpush1.msra.mxu0 0.0
        %328 = vmatprep.subr.mxu0 0.0
        %329 = vmatpush1.msra.mxu0 0.0
        %330 = vmatprep.subr.mxu0 0.0
        %331 = vmatpush1.msra.mxu0 0.0
        %332 = vmatprep.subr.mxu0 0.0
        %333 = vmatpush1.msra.mxu0 0.0
        %334 = vmatprep.subr.mxu0 0.0
        %335 = vmatpush1.msra.mxu0 0.0
        %336 = vmatprep.subr.mxu0 0.0
        %337 = vmatpush1.msra.mxu0 0.0
        %338 = vmatprep.subr.mxu0 0.0
        %339 = vmatpush1.msra.mxu0 0.0
        %340 = vmatprep.subr.mxu0 0.0
        %341 = vmatpush1.msra.mxu0 0.0
        %342 = vmatprep.subr.mxu0 0.0
        %343 = vmatpush1.msra.mxu0 0.0
        %344 = vmatprep.subr.mxu0 0.0
        %345 = vmatpush1.msra.mxu0 0.0
        %346 = vmatprep.subr.mxu0 0.0
        %347 = vmatpush1.msra.mxu0 0.0
        %348 = vmatprep.subr.mxu0 0.0
        %349 = vmatpush1.msra.mxu0 0.0
        %350 = vmatprep.subr.mxu0 0.0
        %351 = vmatpush1.msra.mxu0 0.0
        %352 = vmatprep.subr.mxu0 0.0
        %353 = vmatpush1.msra.mxu0 0.0
        %354 = vmatprep.subr.mxu0 0.0
        %355 = vmatpush1.msra.mxu0 0.0
        %356 = vmatprep.subr.mxu0 0.0
        %357 = vmatpush1.msra.mxu0 0.0
        %358 = vmatprep.subr.mxu0 0.0
        %359 = vmatpush1.msra.mxu0 0.0
        %360 = vmatprep.subr.mxu0 0.0
        %361 = vmatpush1.msra.mxu0 0.0
        %362 = vmatprep.subr.mxu0 0.0
        %363 = vmatpush1.msra.mxu0 0.0
        %364 = vmatprep.subr.mxu0 0.0
        %365 = vmatpush1.msra.mxu0 0.0
        %366 = vmatprep.subr.mxu0 0.0
        %367 = vmatpush1.msra.mxu0 0.0
        %368 = vmatprep.subr.mxu0 0.0
        %369 = vmatpush1.msra.mxu0 0.0
        %370 = vmatprep.subr.mxu0 0.0
        %371 = vmatpush1.msra.mxu0 0.0
        %372 = vmatprep.subr.mxu0 0.0
        %373 = vmatpush1.msra.mxu0 0.0
        %374 = vmatprep.subr.mxu0 0.0
        %375 = vmatpush1.msra.mxu0 0.0
        %376 = vmatprep.subr.mxu0 0.0
        %377 = vmatpush1.msra.mxu0 0.0
        %378 = vmatprep.subr.mxu0 0.0
        %379 = vmatpush1.msra.mxu0 0.0
        %380 = vmatprep.subr.mxu0 0.0
        %381 = vmatpush1.msra.mxu0 0.0
        %382 = vmatprep.subr.mxu0 0.0
        %383 = vmatpush1.msra.mxu0 0.0
        %384 = vmatprep.mubr.f32.mxu0 0.0
        %385 = vmatmul.mubr.f32.gmra.mrb[0].mxu0 %v297
        %v386 = vpop.f32.mrb[0].mxu0
        %v387 = vadd.f32 0.0, %v386
        %v388 = vpop.f32.mrb[0].mxu0
        %389 = vmatprep.mubr.f32.mxu0 0.0
        %390 = vmatmul.mubr.f32.gmra.mrb[0].mxu0 %v300
        %v391 = vpop.f32.mrb[0].mxu0
        %v392 = vadd.f32 0.0, %v391
        %v393 = vpop.f32.mrb[0].mxu0
        %394 = vmatprep.mubr.f32.mxu0 0.0
        %395 = vmatmul.mubr.f32.gmra.mrb[0].mxu0 %v303
        %v396 = vpop.f32.mrb[0].mxu0
        %v397 = vadd.f32 0.0, %v396
        %v398 = vpop.f32.mrb[0].mxu0
        %399 = vmatprep.mubr.f32.mxu0 0.0
        %400 = vmatmul.mubr.f32.gmra.mrb[0].mxu0 %v306
        %v401 = vpop.f32.mrb[0].mxu0
        %v402 = vadd.f32 0.0, %v401
        %v403 = vpop.f32.mrb[0].mxu0
        %404 = vmatprep.mubr.f32.mxu0 0.0
        %405 = vmatmul.mubr.f32.gmra.mrb[0].mxu0 %v309
        %v406 = vpop.f32.mrb[0].mxu0
        %v407 = vadd.f32 0.0, %v406
        %v408 = vpop.f32.mrb[0].mxu0
        %409 = vmatprep.mubr.f32.mxu0 0.0
        %410 = vmatmul.mubr.f32.gmra.mrb[0].mxu0 %v312
        %v411 = vpop.f32.mrb[0].mxu0
        %v412 = vadd.f32 0.0, %v411
        %v413 = vpop.f32.mrb[0].mxu0
        %414 = vmatprep.mubr.f32.mxu0 0.0
        %415 = vmatmul.mubr.f32.gmra.mrb[0].mxu0 %v315
        %v416 = vpop.f32.mrb[0].mxu0
        %v417 = vadd.f32 0.0, %v416
        %v418 = vpop.f32.mrb[0].mxu0
        %419 = vmatprep.mubr.f32.mxu0 0.0
        %420 = vmatmul.mubr.f32.gmra.mrb[0].mxu0 %v318
        %v421 = vpop.f32.mrb[0].mxu0
        %v422 = vadd.f32 0.0, %v421
        %v423 = vpop.f32.mrb[0].mxu0
        %424 = vdwg.mxu0
        %v425 = vld [vmem:[#allocation7] sm:$0xff]
        %v426 = vld [vmem:[#allocation7 + $0x8] sm:$0xff]
        %v427 = vld [vmem:[#allocation7 + $0x10] sm:$0xff]
        %v428 = vld [vmem:[#allocation7 + $0x18] sm:$0xff]
        %v430 = vsel %vm295, %v425, 0
        %v433 = vsel %vm295, %v426, 0
        %v436 = vsel %vm295, %v427, 0
        %v439 = vsel %vm295, %v428, 0
        %441 = vmatprep.subr.mxu0 0.0
        %442 = vmatpush1.msra.mxu0 %v387
        %443 = vmatprep.subr.mxu0 0.0
        %444 = vmatpush1.msra.mxu0 %v392
        %445 = vmatprep.subr.mxu0 0.0
        %446 = vmatpush1.msra.mxu0 0.0
        %447 = vmatprep.subr.mxu0 0.0
        %448 = vmatpush1.msra.mxu0 0.0
        %449 = vmatprep.subr.mxu0 0.0
        %450 = vmatpush1.msra.mxu0 0.0
        %451 = vmatprep.subr.mxu0 0.0
        %452 = vmatpush1.msra.mxu0 0.0
        %453 = vmatprep.subr.mxu0 0.0
        %454 = vmatpush1.msra.mxu0 0.0
        %455 = vmatprep.subr.mxu0 0.0
        %456 = vmatpush1.msra.mxu0 0.0
        %457 = vmatprep.subr.mxu0 0.0
        %458 = vmatpush1.msra.mxu0 0.0
        %459 = vmatprep.subr.mxu0 0.0
        %460 = vmatpush1.msra.mxu0 0.0
        %461 = vmatprep.subr.mxu0 0.0
        %462 = vmatpush1.msra.mxu0 0.0
        %463 = vmatprep.subr.mxu0 0.0
        %464 = vmatpush1.msra.mxu0 0.0
        %465 = vmatprep.subr.mxu0 0.0
        %466 = vmatpush1.msra.mxu0 0.0
        %467 = vmatprep.subr.mxu0 0.0
        %468 = vmatpush1.msra.mxu0 0.0
        %469 = vmatprep.subr.mxu0 0.0
        %470 = vmatpush1.msra.mxu0 0.0
        %471 = vmatprep.subr.mxu0 0.0
        %472 = vmatpush1.msra.mxu0 0.0
        %473 = vmatprep.subr.mxu0 0.0
        %474 = vmatpush1.msra.mxu0 0.0
        %475 = vmatprep.subr.mxu0 0.0
        %476 = vmatpush1.msra.mxu0 0.0
        %477 = vmatprep.subr.mxu0 0.0
        %478 = vmatpush1.msra.mxu0 0.0
        %479 = vmatprep.subr.mxu0 0.0
        %480 = vmatpush1.msra.mxu0 0.0
        %481 = vmatprep.subr.mxu0 0.0
        %482 = vmatpush1.msra.mxu0 0.0
        %483 = vmatprep.subr.mxu0 0.0
        %484 = vmatpush1.msra.mxu0 0.0
        %485 = vmatprep.subr.mxu0 0.0
        %486 = vmatpush1.msra.mxu0 0.0
        %487 = vmatprep.subr.mxu0 0.0
        %488 = vmatpush1.msra.mxu0 0.0
        %489 = vmatprep.subr.mxu0 0.0
        %490 = vmatpush1.msra.mxu0 0.0
        %491 = vmatprep.subr.mxu0 0.0
        %492 = vmatpush1.msra.mxu0 0.0
        %493 = vmatprep.subr.mxu0 0.0
        %494 = vmatpush1.msra.mxu0 0.0
        %495 = vmatprep.subr.mxu0 0.0
        %496 = vmatpush1.msra.mxu0 0.0
        %497 = vmatprep.subr.mxu0 0.0
        %498 = vmatpush1.msra.mxu0 0.0
        %499 = vmatprep.subr.mxu0 0.0
        %500 = vmatpush1.msra.mxu0 0.0
        %501 = vmatprep.subr.mxu0 0.0
        %502 = vmatpush1.msra.mxu0 0.0
        %503 = vmatprep.subr.mxu0 0.0
        %504 = vmatpush1.msra.mxu0 0.0
        %505 = vmatprep.mubr.f32.mxu0 0.0
        %506 = vmatmul.mubr.f32.gmra.mrb[0].mxu0 %v430
        %v507 = vpop.f32.mrb[0].mxu0
        %v508 = vadd.f32 0.0, %v507
        %v509 = vpop.f32.mrb[0].mxu0
        %510 = vmatprep.mubr.f32.mxu0 0.0
        %511 = vmatmul.mubr.f32.gmra.mrb[0].mxu0 %v433
        %v512 = vpop.f32.mrb[0].mxu0
        %v513 = vadd.f32 0.0, %v512
        %v514 = vpop.f32.mrb[0].mxu0
        %515 = vmatprep.mubr.f32.mxu0 0.0
        %516 = vmatmul.mubr.f32.gmra.mrb[0].mxu0 %v436
        %v517 = vpop.f32.mrb[0].mxu0
        %v518 = vadd.f32 0.0, %v517
        %v519 = vpop.f32.mrb[0].mxu0
        %520 = vmatprep.mubr.f32.mxu0 0.0
        %521 = vmatmul.mubr.f32.gmra.mrb[0].mxu0 %v439
        %v522 = vpop.f32.mrb[0].mxu0
        %v523 = vadd.f32 0.0, %v522
        %v524 = vpop.f32.mrb[0].mxu0
        %525 = vdwg.mxu0
        %526 = vmatprep.subr.mxu0 0.0
        %527 = vmatpush1.msra.mxu0 %v397
        %528 = vmatprep.subr.mxu0 0.0
        %529 = vmatpush1.msra.mxu0 %v402
        %530 = vmatprep.subr.mxu0 0.0
        %531 = vmatpush1.msra.mxu0 0.0
        %532 = vmatprep.subr.mxu0 0.0
        %533 = vmatpush1.msra.mxu0 0.0
        %534 = vmatprep.subr.mxu0 0.0
        %535 = vmatpush1.msra.mxu0 0.0
        %536 = vmatprep.subr.mxu0 0.0
        %537 = vmatpush1.msra.mxu0 0.0
        %538 = vmatprep.subr.mxu0 0.0
        %539 = vmatpush1.msra.mxu0 0.0
        %540 = vmatprep.subr.mxu0 0.0
        %541 = vmatpush1.msra.mxu0 0.0
        %542 = vmatprep.subr.mxu0 0.0
        %543 = vmatpush1.msra.mxu0 0.0
        %544 = vmatprep.subr.mxu0 0.0
        %545 = vmatpush1.msra.mxu0 0.0
        %546 = vmatprep.subr.mxu0 0.0
        %547 = vmatpush1.msra.mxu0 0.0
        %548 = vmatprep.subr.mxu0 0.0
        %549 = vmatpush1.msra.mxu0 0.0
        %550 = vmatprep.subr.mxu0 0.0
        %551 = vmatpush1.msra.mxu0 0.0
        %552 = vmatprep.subr.mxu0 0.0
        %553 = vmatpush1.msra.mxu0 0.0
        %554 = vmatprep.subr.mxu0 0.0
        %555 = vmatpush1.msra.mxu0 0.0
        %556 = vmatprep.subr.mxu0 0.0
        %557 = vmatpush1.msra.mxu0 0.0
        %558 = vmatprep.subr.mxu0 0.0
        %559 = vmatpush1.msra.mxu0 0.0
        %560 = vmatprep.subr.mxu0 0.0
        %561 = vmatpush1.msra.mxu0 0.0
        %562 = vmatprep.subr.mxu0 0.0
        %563 = vmatpush1.msra.mxu0 0.0
        %564 = vmatprep.subr.mxu0 0.0
        %565 = vmatpush1.msra.mxu0 0.0
        %566 = vmatprep.subr.mxu0 0.0
        %567 = vmatpush1.msra.mxu0 0.0
        %568 = vmatprep.subr.mxu0 0.0
        %569 = vmatpush1.msra.mxu0 0.0
        %570 = vmatprep.subr.mxu0 0.0
        %571 = vmatpush1.msra.mxu0 0.0
        %572 = vmatprep.subr.mxu0 0.0
        %573 = vmatpush1.msra.mxu0 0.0
        %574 = vmatprep.subr.mxu0 0.0
        %575 = vmatpush1.msra.mxu0 0.0
        %576 = vmatprep.subr.mxu0 0.0
        %577 = vmatpush1.msra.mxu0 0.0
        %578 = vmatprep.subr.mxu0 0.0
        %579 = vmatpush1.msra.mxu0 0.0
        %580 = vmatprep.subr.mxu0 0.0
        %581 = vmatpush1.msra.mxu0 0.0
        %582 = vmatprep.subr.mxu0 0.0
        %583 = vmatpush1.msra.mxu0 0.0
        %584 = vmatprep.subr.mxu0 0.0
        %585 = vmatpush1.msra.mxu0 0.0
        %586 = vmatprep.subr.mxu0 0.0
        %587 = vmatpush1.msra.mxu0 0.0
        %588 = vmatprep.subr.mxu0 0.0
        %589 = vmatpush1.msra.mxu0 0.0
        %590 = vmatprep.mubr.f32.mxu0 0.0
        %591 = vmatmul.mubr.f32.gmra.mrb[0].mxu0 %v430
        %v592 = vpop.f32.mrb[0].mxu0
        %v593 = vadd.f32 0.0, %v592
        %v594 = vpop.f32.mrb[0].mxu0
        %595 = vmatprep.mubr.f32.mxu0 0.0
        %596 = vmatmul.mubr.f32.gmra.mrb[0].mxu0 %v433
        %v597 = vpop.f32.mrb[0].mxu0
        %v598 = vadd.f32 0.0, %v597
        %v599 = vpop.f32.mrb[0].mxu0
        %600 = vmatprep.mubr.f32.mxu0 0.0
        %601 = vmatmul.mubr.f32.gmra.mrb[0].mxu0 %v436
        %v602 = vpop.f32.mrb[0].mxu0
        %v603 = vadd.f32 0.0, %v602
        %v604 = vpop.f32.mrb[0].mxu0
        %605 = vmatprep.mubr.f32.mxu0 0.0
        %606 = vmatmul.mubr.f32.gmra.mrb[0].mxu0 %v439
        %v607 = vpop.f32.mrb[0].mxu0
        %v608 = vadd.f32 0.0, %v607
        %v609 = vpop.f32.mrb[0].mxu0
        %610 = vdwg.mxu0
        %611 = vmatprep.subr.mxu0 0.0
        %612 = vmatpush1.msra.mxu0 %v407
        %613 = vmatprep.subr.mxu0 0.0
        %614 = vmatpush1.msra.mxu0 %v412
        %615 = vmatprep.subr.mxu0 0.0
        %616 = vmatpush1.msra.mxu0 0.0
        %617 = vmatprep.subr.mxu0 0.0
        %618 = vmatpush1.msra.mxu0 0.0
        %619 = vmatprep.subr.mxu0 0.0
        %620 = vmatpush1.msra.mxu0 0.0
        %621 = vmatprep.subr.mxu0 0.0
        %622 = vmatpush1.msra.mxu0 0.0
        %623 = vmatprep.subr.mxu0 0.0
        %624 = vmatpush1.msra.mxu0 0.0
        %625 = vmatprep.subr.mxu0 0.0
        %626 = vmatpush1.msra.mxu0 0.0
        %627 = vmatprep.subr.mxu0 0.0
        %628 = vmatpush1.msra.mxu0 0.0
        %629 = vmatprep.subr.mxu0 0.0
        %630 = vmatpush1.msra.mxu0 0.0
        %631 = vmatprep.subr.mxu0 0.0
        %632 = vmatpush1.msra.mxu0 0.0
        %633 = vmatprep.subr.mxu0 0.0
        %634 = vmatpush1.msra.mxu0 0.0
        %635 = vmatprep.subr.mxu0 0.0
        %636 = vmatpush1.msra.mxu0 0.0
        %637 = vmatprep.subr.mxu0 0.0
        %638 = vmatpush1.msra.mxu0 0.0
        %639 = vmatprep.subr.mxu0 0.0
        %640 = vmatpush1.msra.mxu0 0.0
        %641 = vmatprep.subr.mxu0 0.0
        %642 = vmatpush1.msra.mxu0 0.0
        %643 = vmatprep.subr.mxu0 0.0
        %644 = vmatpush1.msra.mxu0 0.0
        %645 = vmatprep.subr.mxu0 0.0
        %646 = vmatpush1.msra.mxu0 0.0
        %647 = vmatprep.subr.mxu0 0.0
        %648 = vmatpush1.msra.mxu0 0.0
        %649 = vmatprep.subr.mxu0 0.0
        %650 = vmatpush1.msra.mxu0 0.0
        %651 = vmatprep.subr.mxu0 0.0
        %652 = vmatpush1.msra.mxu0 0.0
        %653 = vmatprep.subr.mxu0 0.0
        %654 = vmatpush1.msra.mxu0 0.0
        %655 = vmatprep.subr.mxu0 0.0
        %656 = vmatpush1.msra.mxu0 0.0
        %657 = vmatprep.subr.mxu0 0.0
        %658 = vmatpush1.msra.mxu0 0.0
        %659 = vmatprep.subr.mxu0 0.0
        %660 = vmatpush1.msra.mxu0 0.0
        %661 = vmatprep.subr.mxu0 0.0
        %662 = vmatpush1.msra.mxu0 0.0
        %663 = vmatprep.subr.mxu0 0.0
        %664 = vmatpush1.msra.mxu0 0.0
        %665 = vmatprep.subr.mxu0 0.0
        %666 = vmatpush1.msra.mxu0 0.0
        %667 = vmatprep.subr.mxu0 0.0
        %668 = vmatpush1.msra.mxu0 0.0
        %669 = vmatprep.subr.mxu0 0.0
        %670 = vmatpush1.msra.mxu0 0.0
        %671 = vmatprep.subr.mxu0 0.0
        %672 = vmatpush1.msra.mxu0 0.0
        %673 = vmatprep.subr.mxu0 0.0
        %674 = vmatpush1.msra.mxu0 0.0
        %675 = vmatprep.mubr.f32.mxu0 0.0
        %676 = vmatmul.mubr.f32.gmra.mrb[0].mxu0 %v430
        %v677 = vpop.f32.mrb[0].mxu0
        %v678 = vadd.f32 0.0, %v677
        %v679 = vpop.f32.mrb[0].mxu0
        %680 = vmatprep.mubr.f32.mxu0 0.0
        %681 = vmatmul.mubr.f32.gmra.mrb[0].mxu0 %v433
        %v682 = vpop.f32.mrb[0].mxu0
        %v683 = vadd.f32 0.0, %v682
        %v684 = vpop.f32.mrb[0].mxu0
        %685 = vmatprep.mubr.f32.mxu0 0.0
        %686 = vmatmul.mubr.f32.gmra.mrb[0].mxu0 %v436
        %v687 = vpop.f32.mrb[0].mxu0
        %v688 = vadd.f32 0.0, %v687
        %v689 = vpop.f32.mrb[0].mxu0
        %690 = vmatprep.mubr.f32.mxu0 0.0
        %691 = vmatmul.mubr.f32.gmra.mrb[0].mxu0 %v439
        %v692 = vpop.f32.mrb[0].mxu0
        %v693 = vadd.f32 0.0, %v692
        %v694 = vpop.f32.mrb[0].mxu0
        %695 = vdwg.mxu0
        %696 = vmatprep.subr.mxu0 0.0
        %697 = vmatpush1.msra.mxu0 %v417
        %698 = vmatprep.subr.mxu0 0.0
        %699 = vmatpush1.msra.mxu0 %v422
        %700 = vmatprep.subr.mxu0 0.0
        %701 = vmatpush1.msra.mxu0 0.0
        %702 = vmatprep.subr.mxu0 0.0
        %703 = vmatpush1.msra.mxu0 0.0
        %704 = vmatprep.subr.mxu0 0.0
        %705 = vmatpush1.msra.mxu0 0.0
        %706 = vmatprep.subr.mxu0 0.0
        %707 = vmatpush1.msra.mxu0 0.0
        %708 = vmatprep.subr.mxu0 0.0
        %709 = vmatpush1.msra.mxu0 0.0
        %710 = vmatprep.subr.mxu0 0.0
        %711 = vmatpush1.msra.mxu0 0.0
        %712 = vmatprep.subr.mxu0 0.0
        %713 = vmatpush1.msra.mxu0 0.0
        %714 = vmatprep.subr.mxu0 0.0
        %715 = vmatpush1.msra.mxu0 0.0
        %716 = vmatprep.subr.mxu0 0.0
        %717 = vmatpush1.msra.mxu0 0.0
        %718 = vmatprep.subr.mxu0 0.0
        %719 = vmatpush1.msra.mxu0 0.0
        %720 = vmatprep.subr.mxu0 0.0
        %721 = vmatpush1.msra.mxu0 0.0
        %722 = vmatprep.subr.mxu0 0.0
        %723 = vmatpush1.msra.mxu0 0.0
        %724 = vmatprep.subr.mxu0 0.0
        %725 = vmatpush1.msra.mxu0 0.0
        %726 = vmatprep.subr.mxu0 0.0
        %727 = vmatpush1.msra.mxu0 0.0
        %728 = vmatprep.subr.mxu0 0.0
        %729 = vmatpush1.msra.mxu0 0.0
        %730 = vmatprep.subr.mxu0 0.0
        %731 = vmatpush1.msra.mxu0 0.0
        %732 = vmatprep.subr.mxu0 0.0
        %733 = vmatpush1.msra.mxu0 0.0
        %734 = vmatprep.subr.mxu0 0.0
        %735 = vmatpush1.msra.mxu0 0.0
        %736 = vmatprep.subr.mxu0 0.0
        %737 = vmatpush1.msra.mxu0 0.0
        %738 = vmatprep.subr.mxu0 0.0
        %739 = vmatpush1.msra.mxu0 0.0
        %740 = vmatprep.subr.mxu0 0.0
        %741 = vmatpush1.msra.mxu0 0.0
        %742 = vmatprep.subr.mxu0 0.0
        %743 = vmatpush1.msra.mxu0 0.0
        %744 = vmatprep.subr.mxu0 0.0
        %745 = vmatpush1.msra.mxu0 0.0
        %746 = vmatprep.subr.mxu0 0.0
        %747 = vmatpush1.msra.mxu0 0.0
        %748 = vmatprep.subr.mxu0 0.0
        %749 = vmatpush1.msra.mxu0 0.0
        %750 = vmatprep.subr.mxu0 0.0
        %751 = vmatpush1.msra.mxu0 0.0
        %752 = vmatprep.subr.mxu0 0.0
        %753 = vmatpush1.msra.mxu0 0.0
        %754 = vmatprep.subr.mxu0 0.0
        %755 = vmatpush1.msra.mxu0 0.0
        %756 = vmatprep.subr.mxu0 0.0
        %757 = vmatpush1.msra.mxu0 0.0
        %758 = vmatprep.subr.mxu0 0.0
        %759 = vmatpush1.msra.mxu0 0.0
        %760 = vmatprep.mubr.f32.mxu0 0.0
        %761 = vmatmul.mubr.f32.gmra.mrb[0].mxu0 %v430
        %v762 = vpop.f32.mrb[0].mxu0
        %v763 = vadd.f32 0.0, %v762
        %v764 = vpop.f32.mrb[0].mxu0
        %765 = vmatprep.mubr.f32.mxu0 0.0
        %766 = vmatmul.mubr.f32.gmra.mrb[0].mxu0 %v433
        %v767 = vpop.f32.mrb[0].mxu0
        %v768 = vadd.f32 0.0, %v767
        %v769 = vpop.f32.mrb[0].mxu0
        %770 = vmatprep.mubr.f32.mxu0 0.0
        %771 = vmatmul.mubr.f32.gmra.mrb[0].mxu0 %v436
        %v772 = vpop.f32.mrb[0].mxu0
        %v773 = vadd.f32 0.0, %v772
        %v774 = vpop.f32.mrb[0].mxu0
        %775 = vmatprep.mubr.f32.mxu0 0.0
        %776 = vmatmul.mubr.f32.gmra.mrb[0].mxu0 %v439
        %v777 = vpop.f32.mrb[0].mxu0
        %v778 = vadd.f32 0.0, %v777
        %v779 = vpop.f32.mrb[0].mxu0
        %780 = vdwg.mxu0
        %vm781 = vcmask 261120
        %782 = vst.msk [vmem:[%s284] sm:$0xff] %vm781, %v508
        %783 = vst.msk [vmem:[%s284 + $0x8] sm:$0xff] %vm781, %v513
        %784 = vst.msk [vmem:[%s284 + $0x10] sm:$0xff] %vm781, %v518
        %785 = vst.msk [vmem:[%s284 + $0x18] sm:$0xff] %vm781, %v523
        %786 = vst.msk [vmem:[%s284 + $0x20] sm:$0xff] %vm781, %v593
        %787 = vst.msk [vmem:[%s284 + $0x28] sm:$0xff] %vm781, %v598
        %788 = vst.msk [vmem:[%s284 + $0x30] sm:$0xff] %vm781, %v603
        %789 = vst.msk [vmem:[%s284 + $0x38] sm:$0xff] %vm781, %v608
        %790 = vst.msk [vmem:[%s284 + $0x40] sm:$0xff] %vm781, %v678
        %791 = vst.msk [vmem:[%s284 + $0x48] sm:$0xff] %vm781, %v683
        %792 = vst.msk [vmem:[%s284 + $0x50] sm:$0xff] %vm781, %v688
        %793 = vst.msk [vmem:[%s284 + $0x58] sm:$0xff] %vm781, %v693
        %794 = vst.msk [vmem:[%s284 + $0x60] sm:$0xff] %vm781, %v763
        %795 = vst.msk [vmem:[%s284 + $0x68] sm:$0xff] %vm781, %v768
        %796 = vst.msk [vmem:[%s284 + $0x70] sm:$0xff] %vm781, %v773
        %797 = vst.msk [vmem:[%s284 + $0x78] sm:$0xff] %vm781, %v778
        %v798 = vld [vmem:[%s247] sm:$0xff]
        %v799 = vld [vmem:[%s247 + $0x8] sm:$0xff]
        %v800 = vld [vmem:[%s247 + $0x10] sm:$0xff]
        %v801 = vld [vmem:[%s247 + $0x18] sm:$0xff]
        %v802 = vld [vmem:[%s247 + $0x20] sm:$0xff]
        %v803 = vld [vmem:[%s247 + $0x28] sm:$0xff]
        %v804 = vld [vmem:[%s247 + $0x30] sm:$0xff]
        %v805 = vld [vmem:[%s247 + $0x38] sm:$0xff]
        %v806 = vld [vmem:[%s247 + $0x40] sm:$0xff]
        %v807 = vld [vmem:[%s247 + $0x48] sm:$0xff]
        %v808 = vld [vmem:[%s247 + $0x50] sm:$0xff]
        %v809 = vld [vmem:[%s247 + $0x58] sm:$0xff]
        %v810 = vld [vmem:[%s247 + $0x60] sm:$0xff]
        %v811 = vld [vmem:[%s247 + $0x68] sm:$0xff]
        %v812 = vld [vmem:[%s247 + $0x70] sm:$0xff]
        %v813 = vld [vmem:[%s247 + $0x78] sm:$0xff]
        %s814 = scalar_lea.vmem %s284, 128 [#allocation10]
        %815 = vst.msk [vmem:[%s814] sm:$0xff] %vm781, %v798
        %816 = vst.msk [vmem:[%s814 + $0x8] sm:$0xff] %vm781, %v799
        %817 = vst.msk [vmem:[%s814 + $0x10] sm:$0xff] %vm781, %v800
        %818 = vst.msk [vmem:[%s814 + $0x18] sm:$0xff] %vm781, %v801
        %819 = vst.msk [vmem:[%s814 + $0x20] sm:$0xff] %vm781, %v802
        %820 = vst.msk [vmem:[%s814 + $0x28] sm:$0xff] %vm781, %v803
        %821 = vst.msk [vmem:[%s814 + $0x30] sm:$0xff] %vm781, %v804
        %822 = vst.msk [vmem:[%s814 + $0x38] sm:$0xff] %vm781, %v805
        %823 = vst.msk [vmem:[%s814 + $0x40] sm:$0xff] %vm781, %v806
        %824 = vst.msk [vmem:[%s814 + $0x48] sm:$0xff] %vm781, %v807
        %825 = vst.msk [vmem:[%s814 + $0x50] sm:$0xff] %vm781, %v808
        %826 = vst.msk [vmem:[%s814 + $0x58] sm:$0xff] %vm781, %v809
        %827 = vst.msk [vmem:[%s814 + $0x60] sm:$0xff] %vm781, %v810
        %828 = vst.msk [vmem:[%s814 + $0x68] sm:$0xff] %vm781, %v811
        %829 = vst.msk [vmem:[%s814 + $0x70] sm:$0xff] %vm781, %v812
        %830 = vst.msk [vmem:[%s814 + $0x78] sm:$0xff] %vm781, %v813
        %s831 = sand.u32 %s127, 1
        %s832 = scalar_lea.sflag [#allocation4], %s831
        %s833 = sand.u32 %s127, 1
        %s834 = smul.addr %s833, 256
        %s835 = scalar_lea.vmem [#allocation10], %s834
        // Predicated region
        $region53: #{up_sample_block_pallas.1} parent=35 // pred_check
          %p836 = pneg %p137
        $region54: #{up_sample_block_pallas.1} parent=35 // pred_check_branch
          %838 = sbr.rel (%p836) target = $region56
        $region55: #{up_sample_block_pallas.1} parent=35 // pred_region
          %s840 = ssub.s32 4096, 4096
          %841 = vsyncadd %s832, %s840
          %s842 = smul.addr %s25, 32
          %s843 = smul.addr %s842, 128
          %s844 = scalar_lea.hbm %s4, %s843
          %s845 = sshll.u32 %s835, 4
          %s846 = int_to_ptr.vmem [resolvable:$true] %s845
          %851 = dma.vmem_to_hbm [thread:$0]  %s846, 4096, %s844, %s832, 128, 128, 8
        $region56: #{up_sample_block_pallas.1} parent=35 // pred_fallthru
          _
      $region36: #{up_sample_block_pallas.1} parent=5 // pred_fallthru
        _
      %p852 = scmp.le.s32.totalorder 2, %s20
      // Predicated region
      $region57: #{up_sample_block_pallas.1} parent=5 // pred_check
        %p853 = pneg %p852
      $region58: #{up_sample_block_pallas.1} parent=5 // pred_check_branch
        %855 = sbr.rel (%p853) target = $region60
      $region59: #{up_sample_block_pallas.1} parent=5 // pred_region
        %s856 = ssub.s32 %s20, 2
        // Predicated region
        $region61: #{up_sample_block_pallas.1} parent=59 // pred_check
          %p857 = pneg %p143
        $region62: #{up_sample_block_pallas.1} parent=59 // pred_check_branch
          %859 = sbr.rel (%p857) target = $region64
        $region63: #{up_sample_block_pallas.1} parent=59 // pred_region
          %s860 = sand.u32 %s128, 1
          %s861 = scalar_lea.sflag [#allocation4], %s860
          %s862 = sand.u32 %s128, 1
          %s863 = smul.addr %s862, 256
          %s864 = scalar_lea.vmem [#allocation10], %s863
          %865 = dma.done %s861, 4096
        $region64: #{up_sample_block_pallas.1} parent=59 // pred_fallthru
          _
      $region60: #{up_sample_block_pallas.1} parent=5 // pred_fallthru
        _
    $region6: #{up_sample_block_pallas.1} parent=1 // loop_footer
      %s24 = sadd.s32 1, %s20
    $region7: #{up_sample_block_pallas.1} parent=1 // loop_footer_branch
      %19 = sbr.rel target = $region3
    $region8: #{up_sample_block_pallas.1} parent=1 // loop_exit
      _
    %866 = vsyncpa [#allocation3], 1
    %s867 = scalar_lea.sflag [#allocation3], 1
    %868 = vsyncpa %s867, 1
    %869 = vsyncpa [#allocation6], 1
    %s870 = scalar_lea.sflag [#allocation6], 1
    %871 = vsyncpa %s870, 1
    %872 = vsyncpa [#allocation9], 1
    %873 = vsyncpa [#allocation4], 1
    %s874 = scalar_lea.sflag [#allocation4], 1
    %875 = vsyncpa %s874, 1

</llo_original>
